<compile_context>
chip_gen: v7x
topology: tpu7x:2x2x1
jax: 0.10.0
libtpu: 0.0.40
codegen_flags: <defaults>
</compile_context>

<pallas_src>
import functools

import jax
import jax.numpy as jnp
from jax import lax
from jax.experimental import pallas as pl
from jax.experimental.pallas import tpu as pltpu

EPS = 1e-5
LANE = 128                       # pad channel / K axes to multiples of this
VMEM_LIMIT = 48 * 1024 * 1024    # explicit scoped-VMEM limit (v7x-safe)


# ----------------------------------------------------------------------------
# small helpers
# ----------------------------------------------------------------------------
def _round_up(x, m):
    return (x + m - 1) // m * m


def _row_tile(m):
    # mem-bound kernels want big row tiles; m is always a multiple of 128 here
    for t in (1024, 512, 256, 128, 64, 32, 16, 8):
        if t <= m and m % t == 0:
            return t
    return m  # full extent (allowed: block == array dim)


def _col_tile(k):
    for t in (512, 256, 128):
        if t <= k and k % t == 0:
            return t
    return k


def _cparams(*sem):
    return pltpu.CompilerParams(dimension_semantics=sem,
                                vmem_limit_bytes=VMEM_LIMIT)


def _pad2d(a, rows, cols):
    m, c = a.shape
    return jnp.pad(a, ((0, rows - m), (0, cols - c)))


# ----------------------------------------------------------------------------
# Pallas kernels
# ----------------------------------------------------------------------------
def _matmul_stats_kernel(a_ref, b_ref, y_ref, sum_ref, sq_ref, acc_ref):
    """One (row-tile, K-tile) step of the conv-as-matmul, with the per-channel
    BN sum / sum-of-squares reduction fused in as an epilogue."""
    i = pl.program_id(0)            # row tile
    k = pl.program_id(1)            # K (contraction) tile
    nk = pl.num_programs(1)

    @pl.when(k == 0)
    def _():
        acc_ref[...] = jnp.zeros_like(acc_ref)

    @pl.when(jnp.logical_and(i == 0, k == 0))
    def _():
        sum_ref[...] = jnp.zeros_like(sum_ref)
        sq_ref[...] = jnp.zeros_like(sq_ref)

    # bf16 operands, f32 accumulation on the MXU (no HIGHEST multi-pass).
    acc_ref[...] += jnp.dot(a_ref[...], b_ref[...],
                            preferred_element_type=jnp.float32)

    @pl.when(k == nk - 1)
    def _():
        y = acc_ref[...]
        y_ref[...] = y
        sum_ref[...] += jnp.sum(y, axis=0, keepdims=True)
        sq_ref[...] += jnp.sum(y * y, axis=0, keepdims=True)


def _bn_relu_kernel(y_ref, s_ref, b_ref, o_ref):
    # relu(BN(conv1)) with BN folded to y*scale + shift
    o_ref[...] = jnp.maximum(y_ref[...] * s_ref[...] + b_ref[...], 0.0)


def _bn_add_bn_relu_kernel(y_ref, s_ref, b_ref, r_ref, rs_ref, rb_ref, o_ref):
    # relu(BN(conv2) + BN(shortcut)) - shortcut affine folded in (one HBM pass)
    o_ref[...] = jnp.maximum(
        y_ref[...] * s_ref[...] + b_ref[...]
        + r_ref[...] * rs_ref[...] + rb_ref[...], 0.0)


# ----------------------------------------------------------------------------
# Pallas wrappers
# ----------------------------------------------------------------------------
def pallas_matmul_stats(a_bf16, b_bf16):
    """(m, K) @ (K, C) -> y (m, C) f32, plus per-channel sum and sum-of-squares."""
    m, kdim = a_bf16.shape
    _, c = b_bf16.shape
    tm = _row_tile(m)
    tk = _col_tile(kdim)
    return pl.pallas_call(
        _matmul_stats_kernel,
        out_shape=(
            jax.ShapeDtypeStruct((m, c), jnp.float32),
            jax.ShapeDtypeStruct((1, c), jnp.float32),
            jax.ShapeDtypeStruct((1, c), jnp.float32),
        ),
        grid_spec=pltpu.PrefetchScalarGridSpec(
            num_scalar_prefetch=0,
            grid=(m // tm, kdim // tk),
            in_specs=[
                pl.BlockSpec((tm, tk), lambda i, k: (i, k)),
                pl.BlockSpec((tk, c), lambda i, k: (k, 0)),
            ],
            out_specs=(
                pl.BlockSpec((tm, c), lambda i, k: (i, 0)),
                pl.BlockSpec((1, c), lambda i, k: (0, 0)),
                pl.BlockSpec((1, c), lambda i, k: (0, 0)),
            ),
            scratch_shapes=[pltpu.VMEM((tm, c), jnp.float32)],
        ),
        # stats outputs are resident across both axes -> arbitrary
        compiler_params=_cparams("arbitrary", "arbitrary"),
    )(a_bf16, b_bf16)


def pallas_bn_relu(y, scale, shift):
    m, c = y.shape
    tm = _row_tile(m)
    return pl.pallas_call(
        _bn_relu_kernel,
        out_shape=jax.ShapeDtypeStruct((m, c), jnp.float32),
        grid_spec=pltpu.PrefetchScalarGridSpec(
            num_scalar_prefetch=0,
            grid=(m // tm,),
            in_specs=[
                pl.BlockSpec((tm, c), lambda i: (i, 0)),
                pl.BlockSpec((1, c), lambda i: (0, 0)),
                pl.BlockSpec((1, c), lambda i: (0, 0)),
            ],
            out_specs=pl.BlockSpec((tm, c), lambda i: (i, 0)),
        ),
        compiler_params=_cparams("parallel"),
    )(y, scale.reshape(1, c), shift.reshape(1, c))


def pallas_bn_add_bn_relu(y, s, b, r, rs, rb):
    m, c = y.shape
    tm = _row_tile(m)
    return pl.pallas_call(
        _bn_add_bn_relu_kernel,
        out_shape=jax.ShapeDtypeStruct((m, c), jnp.float32),
        grid_spec=pltpu.PrefetchScalarGridSpec(
            num_scalar_prefetch=0,
            grid=(m // tm,),
            in_specs=[
                pl.BlockSpec((tm, c), lambda i: (i, 0)),
                pl.BlockSpec((1, c), lambda i: (0, 0)),
                pl.BlockSpec((1, c), lambda i: (0, 0)),
                pl.BlockSpec((tm, c), lambda i: (i, 0)),
                pl.BlockSpec((1, c), lambda i: (0, 0)),
                pl.BlockSpec((1, c), lambda i: (0, 0)),
            ],
            out_specs=pl.BlockSpec((tm, c), lambda i: (i, 0)),
        ),
        compiler_params=_cparams("parallel"),
    )(y, s.reshape(1, c), b.reshape(1, c), r, rs.reshape(1, c), rb.reshape(1, c))


# ----------------------------------------------------------------------------
# Glue: im2col, conv+stats, BN fold, full forward
# ----------------------------------------------------------------------------
def im2col(x_nhwc, k, stride, pad):
    # TODO(synk): replace with an in-kernel halo-tile gather to avoid the
    # k*k-inflated patch matrix round-trip through HBM.
    n, h, w, c = x_nhwc.shape
    ho = (h + 2 * pad - k) // stride + 1
    wo = (w + 2 * pad - k) // stride + 1
    xp = jnp.pad(x_nhwc, ((0, 0), (pad, pad), (pad, pad), (0, 0)))
    cols = []
    for dy in range(k):
        for dx in range(k):
            cols.append(xp[:, dy:dy + ho * stride:stride, dx:dx + wo * stride:stride, :])
    patches = jnp.concatenate(cols, axis=-1)      # (N, Ho, Wo, k*k*C)
    return patches.reshape(n * ho * wo, k * k * c), ho, wo


def conv_bn_stats(x_nhwc, w_oihw, stride, pad):
    """conv via im2col matmul (bf16 MXU, f32 acc) fused with per-channel BN
    sum / sum-of-squares.  All lane axes padded to LANE; rows padded to LANE."""
    cout, cin, k, _ = w_oihw.shape
    patches, ho, wo = im2col(x_nhwc, k, stride, pad)
    m_real, kdim = patches.shape
    m_pad = _round_up(m_real, LANE)
    k_pad = _round_up(kdim, LANE)
    c_pad = _round_up(cout, LANE)

    a = _pad2d(patches, m_pad, k_pad).astype(jnp.bfloat16)
    # patch col order is (kh, kw, cin) -> weight must be (kh, kw, cin, cout)
    wm = jnp.transpose(w_oihw, (2, 3, 1, 0)).reshape(kdim, cout)
    b = _pad2d(wm, k_pad, c_pad).astype(jnp.bfloat16)

    y, s, q = pallas_matmul_stats(a, b)           # y: (m_pad, c_pad) f32
    return y, s[0], q[0], ho, wo, m_real


def bn_fold(s, q, count, gamma, beta, c_pad):
    # BN(y) == y*scale + shift  (training mode, biased variance)
    mean = s / count
    var = jnp.maximum(q / count - mean * mean, 0.0)
    g = jnp.pad(gamma, (0, c_pad - gamma.shape[0]))
    b = jnp.pad(beta, (0, c_pad - beta.shape[0]))
    scale = g * lax.rsqrt(var + EPS)
    shift = b - mean * scale
    return scale, shift


def init_residual_block_params(key, inchannel, outchannel, stride):
    ks = jax.random.split(key, 9)
    p = {
        "w1": 0.1 * jax.random.normal(ks[0], (outchannel, inchannel, 3, 3), jnp.float32),
        "g1": jax.random.uniform(ks[1], (outchannel,), jnp.float32, 0.5, 1.5),
        "b1": 0.1 * jax.random.normal(ks[2], (outchannel,), jnp.float32),
        "w2": 0.1 * jax.random.normal(ks[3], (outchannel, outchannel, 3, 3), jnp.float32),
        "g2": jax.random.uniform(ks[4], (outchannel,), jnp.float32, 0.5, 1.5),
        "b2": 0.1 * jax.random.normal(ks[5], (outchannel,), jnp.float32),
    }
    if stride != 1 or inchannel != outchannel:
        p["wsc"] = 0.1 * jax.random.normal(ks[6], (outchannel, inchannel, 1, 1), jnp.float32)
        p["gsc"] = jax.random.uniform(ks[7], (outchannel,), jnp.float32, 0.5, 1.5)
        p["bsc"] = 0.1 * jax.random.normal(ks[8], (outchannel,), jnp.float32)
    return p


def residual_block_forward(x_nchw, params, stride):
    x = jnp.transpose(x_nchw, (0, 2, 3, 1)).astype(jnp.float32)   # NCHW -> NHWC
    n, h, w, cin = x.shape
    cout = params["w1"].shape[0]
    c_pad = _round_up(cout, LANE)

    # left: conv3x3(stride) with fused BN stats, then BN+ReLU
    y1, s1, q1, ho, wo, m_real = conv_bn_stats(x, params["w1"], stride, 1)
    sc1, sh1 = bn_fold(s1, q1, m_real, params["g1"], params["b1"], c_pad)
    a1 = pallas_bn_relu(y1, sc1, sh1)                              # (m_pad, c_pad)
    a1 = a1[:m_real].reshape(n, ho, wo, c_pad)[..., :cout]         # un-pad for next conv

    # left: conv3x3 with fused BN stats; its BN affine is deferred to the final kernel
    y2, s2, q2, _, _, _ = conv_bn_stats(a1, params["w2"], 1, 1)
    sc2, sh2 = bn_fold(s2, q2, m_real, params["g2"], params["b2"], c_pad)
    m_pad = y2.shape[0]

    # shortcut branch (raw conv output + its folded BN goes into the final kernel)
    if "wsc" in params:
        ysc, ss, qs, _, _, _ = conv_bn_stats(x, params["wsc"], stride, 0)
        scs, shs = bn_fold(ss, qs, m_real, params["gsc"], params["bsc"], c_pad)
        r = ysc
    else:
        r = _pad2d(x.reshape(n * h * w, cin), m_pad, c_pad)        # identity shortcut
        scs = jnp.ones((c_pad,), jnp.float32)
        shs = jnp.zeros((c_pad,), jnp.float32)

    # relu(BN(conv2) + BN(shortcut)) in a single pass
    out = pallas_bn_add_bn_relu(y2, sc2, sh2, r, scs, shs)
    out = out[:m_real].reshape(n, ho, wo, c_pad)[..., :cout]
    return jnp.transpose(out, (0, 3, 1, 2))                        # back to NCHW


# ----------------------------------------------------------------------------
# Pure-JAX reference (same numeric contract: bf16 MXU operands, f32 accumulate)
# ----------------------------------------------------------------------------
def _conv_ref(x_nhwc, w_oihw, stride, pad):
    return lax.conv_general_dilated(
        x_nhwc.astype(jnp.bfloat16),
        jnp.transpose(w_oihw, (2, 3, 1, 0)).astype(jnp.bfloat16),
        window_strides=(stride, stride),
        padding=[(pad, pad), (pad, pad)],
        dimension_numbers=("NHWC", "HWIO", "NHWC"),
        preferred_element_type=jnp.float32,
    )


def _bn_ref(y, gamma, beta):
    mean = y.mean(axis=(0, 1, 2))
    var = y.var(axis=(0, 1, 2))       # biased, training-mode forward
    return (y - mean) * gamma * lax.rsqrt(var + EPS) + beta


def residual_block_ref(x_nchw, params, stride):
    x = jnp.transpose(x_nchw, (0, 2, 3, 1)).astype(jnp.float32)
    a1 = jax.nn.relu(_bn_ref(_conv_ref(x, params["w1"], stride, 1), params["g1"], params["b1"]))
    y2 = _bn_ref(_conv_ref(a1, params["w2"], 1, 1), params["g2"], params["b2"])
    if "wsc" in params:
        sc = _bn_ref(_conv_ref(x, params["wsc"], stride, 0), params["gsc"], params["bsc"])
    else:
        sc = x
    out = jax.nn.relu(y2 + sc)
    return jnp.transpose(out, (0, 3, 1, 2))


# ----------------------------------------------------------------------------
if __name__ == "__main__":
    key = jax.random.PRNGKey(0)
    k_x1, k_p1, k_x2, k_p2 = jax.random.split(key, 4)

    # case 1: projection shortcut (stride=2, 4 -> 8 channels)
    x1 = jax.random.normal(k_x1, (2, 4, 16, 16), jnp.float32)
    p1 = init_residual_block_params(k_p1, 4, 8, 2)
    fwd1 = jax.jit(functools.partial(residual_block_forward, stride=2))
    out1 = jax.block_until_ready(fwd1(x1, p1))
    ref1 = residual_block_ref(x1, p1, 2)
    assert out1.shape == (2, 8, 8, 8), out1.shape
    e1 = jnp.abs(out1 - ref1)
    assert float(jnp.max(e1)) < 3e-2 and float(jnp.mean(e1)) < 1e-3, (
        float(jnp.max(e1)), float(jnp.mean(e1)))

    # case 2: identity shortcut (stride=1, same channels)
    x2 = jax.random.normal(k_x2, (2, 8, 8, 8), jnp.float32)
    p2 = init_residual_block_params(k_p2, 8, 8, 1)
    fwd2 = jax.jit(functools.partial(residual_block_forward, stride=1))
    out2 = jax.block_until_ready(fwd2(x2, p2))
    ref2 = residual_block_ref(x2, p2, 1)
    assert out2.shape == (2, 8, 8, 8), out2.shape
    e2 = jnp.abs(out2 - ref2)
    assert float(jnp.max(e2)) < 3e-2 and float(jnp.mean(e2)) < 1e-3, (
        float(jnp.max(e2)), float(jnp.mean(e2)))

    print("KERNEL_OK")
</pallas_src>

<mosaic_0001>
module attributes {stable_mosaic.version = 11 : i64} {
  func.func @_bn_relu_kernel(%arg0: i32, %arg1: memref<128x128xf32, #tpu.memory_space<vmem>>, %arg2: memref<1x128xf32, #tpu.memory_space<vmem>>, %arg3: memref<1x128xf32, #tpu.memory_space<vmem>>, %arg4: memref<128x128xf32, #tpu.memory_space<vmem>>) attributes {dimension_semantics = [#tpu.dimension_semantics<parallel>], iteration_bounds = array<i64: 1>, scalar_prefetch = 0 : i64, scratch_operands = 0 : i64, tpu.core_type = #tpu.core_type<tc>, window_params = [{transform_indices = @transform_0, window_bounds = array<i64: 128, 128>}, {pipeline_mode = #tpu.pipeline_mode<synchronous>, transform_indices = @transform_1, window_bounds = array<i64: 1, 128>}, {pipeline_mode = #tpu.pipeline_mode<synchronous>, transform_indices = @transform_2, window_bounds = array<i64: 1, 128>}, {transform_indices = @transform_3, window_bounds = array<i64: 128, 128>}]} {
    %c0 = arith.constant 0 : index
    %c0_0 = arith.constant 0 : index
    %0 = vector.load %arg1[%c0, %c0_0] : memref<128x128xf32, #tpu.memory_space<vmem>>, vector<128x128xf32>
    %c0_1 = arith.constant 0 : index
    %c0_2 = arith.constant 0 : index
    %1 = vector.load %arg2[%c0_1, %c0_2] : memref<1x128xf32, #tpu.memory_space<vmem>>, vector<1x128xf32>
    %2 = vector.broadcast %1 : vector<1x128xf32> to vector<128x128xf32>
    %3 = arith.mulf %0, %2 : vector<128x128xf32>
    %c0_3 = arith.constant 0 : index
    %c0_4 = arith.constant 0 : index
    %4 = vector.load %arg3[%c0_3, %c0_4] : memref<1x128xf32, #tpu.memory_space<vmem>>, vector<1x128xf32>
    %5 = vector.broadcast %4 : vector<1x128xf32> to vector<128x128xf32>
    %6 = arith.addf %3, %5 : vector<128x128xf32>
    %cst = arith.constant 0.000000e+00 : f32
    %7 = vector.broadcast %cst : f32 to vector<128x128xf32>
    %8 = arith.maximumf %6, %7 : vector<128x128xf32>
    %c0_5 = arith.constant 0 : index
    %c0_6 = arith.constant 0 : index
    %9 = vector.load %arg4[%c0_5, %c0_6] : memref<128x128xf32, #tpu.memory_space<vmem>>, vector<128x128xf32>
    tpu.vector_store %arg4[%c0_5, %c0_6], %8 {strides = array<i32>} : memref<128x128xf32, #tpu.memory_space<vmem>>, vector<128x128xf32>,
    return
  }
  func.func @transform_0(%arg0: i32) -> (i32, i32) {
    %c0_i32 = arith.constant 0 : i32
    %c0_i32_0 = arith.constant 0 : i32
    return %arg0, %c0_i32 : i32, i32
  }
  func.func @transform_1(%arg0: i32) -> (i32, i32) {
    %c0_i32 = arith.constant 0 : i32
    %c0_i32_0 = arith.constant 0 : i32
    %c0_i32_1 = arith.constant 0 : i32
    return %c0_i32, %c0_i32_0 : i32, i32
  }
  func.func @transform_2(%arg0: i32) -> (i32, i32) {
    %c0_i32 = arith.constant 0 : i32
    %c0_i32_0 = arith.constant 0 : i32
    %c0_i32_1 = arith.constant 0 : i32
    return %c0_i32, %c0_i32_0 : i32, i32
  }
  func.func @transform_3(%arg0: i32) -> (i32, i32) {
    %c0_i32 = arith.constant 0 : i32
    %c0_i32_0 = arith.constant 0 : i32
    return %arg0, %c0_i32 : i32, i32
  }
}

module attributes {stable_mosaic.version = 11 : i64} {
  func.func @_matmul_stats_kernel(%arg0: i32, %arg1: i32, %arg2: memref<128x128xbf16, #tpu.memory_space<vmem>>, %arg3: memref<128x128xbf16, #tpu.memory_space<vmem>>, %arg4: memref<128x128xf32, #tpu.memory_space<vmem>>, %arg5: memref<1x128xf32, #tpu.memory_space<vmem>>, %arg6: memref<1x128xf32, #tpu.memory_space<vmem>>, %arg7: memref<128x128xf32, #tpu.memory_space<vmem>>) attributes {dimension_semantics = [#tpu.dimension_semantics<arbitrary>, #tpu.dimension_semantics<arbitrary>], iteration_bounds = array<i64: 1, 1>, scalar_prefetch = 0 : i64, scratch_operands = 1 : i64, tpu.core_type = #tpu.core_type<tc>, window_params = [{transform_indices = @transform_0, window_bounds = array<i64: 128, 128>}, {transform_indices = @transform_1, window_bounds = array<i64: 128, 128>}, {transform_indices = @transform_2, window_bounds = array<i64: 128, 128>}, {pipeline_mode = #tpu.pipeline_mode<synchronous>, transform_indices = @transform_3, window_bounds = array<i64: 1, 128>}, {pipeline_mode = #tpu.pipeline_mode<synchronous>, transform_indices = @transform_4, window_bounds = array<i64: 1, 128>}]} {
    %c0_i32 = arith.constant 0 : i32
    %0 = arith.cmpi eq, %arg1, %c0_i32 : i32
    %1 = arith.extui %0 : i1 to i32
    %c0_i32_0 = arith.constant 0 : i32
    %2 = arith.cmpi ne, %1, %c0_i32_0 : i32
    scf.if %2 {
      %cst_13 = arith.constant 0.000000e+00 : f32
      %17 = vector.broadcast %cst_13 : f32 to vector<128x128xf32>
      %c0_14 = arith.constant 0 : index
      %c0_15 = arith.constant 0 : index
      %18 = vector.load %arg7[%c0_14, %c0_15] : memref<128x128xf32, #tpu.memory_space<vmem>>, vector<128x128xf32>
      tpu.vector_store %arg7[%c0_14, %c0_15], %17 {strides = array<i32>} : memref<128x128xf32, #tpu.memory_space<vmem>>, vector<128x128xf32>,
    } else {
    }
    %c0_i32_1 = arith.constant 0 : i32
    %3 = arith.cmpi eq, %arg0, %c0_i32_1 : i32
    %c0_i32_2 = arith.constant 0 : i32
    %4 = arith.cmpi eq, %arg1, %c0_i32_2 : i32
    %5 = arith.andi %3, %4 : i1
    %6 = arith.extui %5 : i1 to i32
    %c0_i32_3 = arith.constant 0 : i32
    %7 = arith.cmpi ne, %6, %c0_i32_3 : i32
    scf.if %7 {
      %cst_13 = arith.constant 0.000000e+00 : f32
      %17 = vector.broadcast %cst_13 : f32 to vector<1x128xf32>
      %c0_14 = arith.constant 0 : index
      %c0_15 = arith.constant 0 : index
      %18 = vector.load %arg5[%c0_14, %c0_15] : memref<1x128xf32, #tpu.memory_space<vmem>>, vector<1x128xf32>
      tpu.vector_store %arg5[%c0_14, %c0_15], %17 {strides = array<i32>} : memref<1x128xf32, #tpu.memory_space<vmem>>, vector<1x128xf32>,
      %cst_16 = arith.constant 0.000000e+00 : f32
      %19 = vector.broadcast %cst_16 : f32 to vector<1x128xf32>
      %c0_17 = arith.constant 0 : index
      %c0_18 = arith.constant 0 : index
      %20 = vector.load %arg6[%c0_17, %c0_18] : memref<1x128xf32, #tpu.memory_space<vmem>>, vector<1x128xf32>
      tpu.vector_store %arg6[%c0_17, %c0_18], %19 {strides = array<i32>} : memref<1x128xf32, #tpu.memory_space<vmem>>, vector<1x128xf32>,
    } else {
    }
    %c0 = arith.constant 0 : index
    %c0_4 = arith.constant 0 : index
    %8 = vector.load %arg7[%c0, %c0_4] : memref<128x128xf32, #tpu.memory_space<vmem>>, vector<128x128xf32>
    %c0_5 = arith.constant 0 : index
    %c0_6 = arith.constant 0 : index
    %9 = vector.load %arg2[%c0_5, %c0_6] : memref<128x128xbf16, #tpu.memory_space<vmem>>, vector<128x128xbf16>
    %c0_7 = arith.constant 0 : index
    %c0_8 = arith.constant 0 : index
    %10 = vector.load %arg3[%c0_7, %c0_8] : memref<128x128xbf16, #tpu.memory_space<vmem>>, vector<128x128xbf16>
    %cst = arith.constant dense<0.000000e+00> : vector<128x128xf32>
    %11 = tpu.matmul %9, %10, %cst {dimension_numbers = #tpu.dot_dimension_numbers<[1], [0], [0], [1], [0, 0, 1, 1], [], []>} : vector<128x128xbf16>, vector<128x128xbf16>, vector<128x128xf32> -> vector<128x128xf32>
    %12 = arith.addf %8, %11 : vector<128x128xf32>
    %c0_9 = arith.constant 0 : index
    %c0_10 = arith.constant 0 : index
    %13 = vector.load %arg7[%c0_9, %c0_10] : memref<128x128xf32, #tpu.memory_space<vmem>>, vector<128x128xf32>
    tpu.vector_store %arg7[%c0_9, %c0_10], %12 {strides = array<i32>} : memref<128x128xf32, #tpu.memory_space<vmem>>, vector<128x128xf32>,
    %c0_i32_11 = arith.constant 0 : i32
    %14 = arith.cmpi eq, %arg1, %c0_i32_11 : i32
    %15 = arith.extui %14 : i1 to i32
    %c0_i32_12 = arith.constant 0 : i32
    %16 = arith.cmpi ne, %15, %c0_i32_12 : i32
    scf.if %16 {
      %c0_13 = arith.constant 0 : index
      %c0_14 = arith.constant 0 : index
      %17 = vector.load %arg7[%c0_13, %c0_14] : memref<128x128xf32, #tpu.memory_space<vmem>>, vector<128x128xf32>
      %c0_15 = arith.constant 0 : index
      %c0_16 = arith.constant 0 : index
      %18 = vector.load %arg4[%c0_15, %c0_16] : memref<128x128xf32, #tpu.memory_space<vmem>>, vector<128x128xf32>
      tpu.vector_store %arg4[%c0_15, %c0_16], %17 {strides = array<i32>} : memref<128x128xf32, #tpu.memory_space<vmem>>, vector<128x128xf32>,
      %c0_17 = arith.constant 0 : index
      %c0_18 = arith.constant 0 : index
      %19 = vector.load %arg5[%c0_17, %c0_18] : memref<1x128xf32, #tpu.memory_space<vmem>>, vector<1x128xf32>
      %cst_19 = arith.constant dense<0.000000e+00> : vector<128xf32>
      %20 = vector.multi_reduction <add>, %17, %cst_19 [0] : vector<128x128xf32> to vector<128xf32>
      %21 = vector.shape_cast %20 : vector<128xf32> to vector<1x128xf32>
      %22 = arith.addf %19, %21 : vector<1x128xf32>
      %c0_20 = arith.constant 0 : index
      %c0_21 = arith.constant 0 : index
      %23 = vector.load %arg5[%c0_20, %c0_21] : memref<1x128xf32, #tpu.memory_space<vmem>>, vector<1x128xf32>
      tpu.vector_store %arg5[%c0_20, %c0_21], %22 {strides = array<i32>} : memref<1x128xf32, #tpu.memory_space<vmem>>, vector<1x128xf32>,
      %c0_22 = arith.constant 0 : index
      %c0_23 = arith.constant 0 : index
      %24 = vector.load %arg6[%c0_22, %c0_23] : memref<1x128xf32, #tpu.memory_space<vmem>>, vector<1x128xf32>
      %25 = arith.mulf %17, %17 : vector<128x128xf32>
      %cst_24 = arith.constant dense<0.000000e+00> : vector<128xf32>
      %26 = vector.multi_reduction <add>, %25, %cst_24 [0] : vector<128x128xf32> to vector<128xf32>
      %27 = vector.shape_cast %26 : vector<128xf32> to vector<1x128xf32>
      %28 = arith.addf %24, %27 : vector<1x128xf32>
      %c0_25 = arith.constant 0 : index
      %c0_26 = arith.constant 0 : index
      %29 = vector.load %arg6[%c0_25, %c0_26] : memref<1x128xf32, #tpu.memory_space<vmem>>, vector<1x128xf32>
      tpu.vector_store %arg6[%c0_25, %c0_26], %28 {strides = array<i32>} : memref<1x128xf32, #tpu.memory_space<vmem>>, vector<1x128xf32>,
    } else {
    }
    return
  }
  func.func @transform_0(%arg0: i32, %arg1: i32) -> (i32, i32) {
    %c0_i32 = arith.constant 0 : i32
    return %arg0, %arg1 : i32, i32
  }
  func.func @transform_1(%arg0: i32, %arg1: i32) -> (i32, i32) {
    %c0_i32 = arith.constant 0 : i32
    %c0_i32_0 = arith.constant 0 : i32
    return %arg1, %c0_i32 : i32, i32
  }
  func.func @transform_2(%arg0: i32, %arg1: i32) -> (i32, i32) {
    %c0_i32 = arith.constant 0 : i32
    %c0_i32_0 = arith.constant 0 : i32
    return %arg0, %c0_i32 : i32, i32
  }
  func.func @transform_3(%arg0: i32, %arg1: i32) -> (i32, i32) {
    %c0_i32 = arith.constant 0 : i32
    %c0_i32_0 = arith.constant 0 : i32
    %c0_i32_1 = arith.constant 0 : i32
    return %c0_i32, %c0_i32_0 : i32, i32
  }
  func.func @transform_4(%arg0: i32, %arg1: i32) -> (i32, i32) {
    %c0_i32 = arith.constant 0 : i32
    %c0_i32_0 = arith.constant 0 : i32
    %c0_i32_1 = arith.constant 0 : i32
    return %c0_i32, %c0_i32_0 : i32, i32
  }
}

module attributes {stable_mosaic.version = 11 : i64} {
  func.func @_bn_add_bn_relu_kernel(%arg0: i32, %arg1: memref<128x128xf32, #tpu.memory_space<vmem>>, %arg2: memref<1x128xf32, #tpu.memory_space<vmem>>, %arg3: memref<1x128xf32, #tpu.memory_space<vmem>>, %arg4: memref<128x128xf32, #tpu.memory_space<vmem>>, %arg5: memref<1x128xf32, #tpu.memory_space<vmem>>, %arg6: memref<1x128xf32, #tpu.memory_space<vmem>>, %arg7: memref<128x128xf32, #tpu.memory_space<vmem>>) attributes {dimension_semantics = [#tpu.dimension_semantics<parallel>], iteration_bounds = array<i64: 1>, scalar_prefetch = 0 : i64, scratch_operands = 0 : i64, tpu.core_type = #tpu.core_type<tc>, window_params = [{transform_indices = @transform_0, window_bounds = array<i64: 128, 128>}, {pipeline_mode = #tpu.pipeline_mode<synchronous>, transform_indices = @transform_1, window_bounds = array<i64: 1, 128>}, {pipeline_mode = #tpu.pipeline_mode<synchronous>, transform_indices = @transform_2, window_bounds = array<i64: 1, 128>}, {transform_indices = @transform_3, window_bounds = array<i64: 128, 128>}, {pipeline_mode = #tpu.pipeline_mode<synchronous>, transform_indices = @transform_4, window_bounds = array<i64: 1, 128>}, {pipeline_mode = #tpu.pipeline_mode<synchronous>, transform_indices = @transform_5, window_bounds = array<i64: 1, 128>}, {transform_indices = @transform_6, window_bounds = array<i64: 128, 128>}]} {
    %c0 = arith.constant 0 : index
    %c0_0 = arith.constant 0 : index
    %0 = vector.load %arg1[%c0, %c0_0] : memref<128x128xf32, #tpu.memory_space<vmem>>, vector<128x128xf32>
    %c0_1 = arith.constant 0 : index
    %c0_2 = arith.constant 0 : index
    %1 = vector.load %arg2[%c0_1, %c0_2] : memref<1x128xf32, #tpu.memory_space<vmem>>, vector<1x128xf32>
    %2 = vector.broadcast %1 : vector<1x128xf32> to vector<128x128xf32>
    %3 = arith.mulf %0, %2 : vector<128x128xf32>
    %c0_3 = arith.constant 0 : index
    %c0_4 = arith.constant 0 : index
    %4 = vector.load %arg3[%c0_3, %c0_4] : memref<1x128xf32, #tpu.memory_space<vmem>>, vector<1x128xf32>
    %5 = vector.broadcast %4 : vector<1x128xf32> to vector<128x128xf32>
    %6 = arith.addf %3, %5 : vector<128x128xf32>
    %c0_5 = arith.constant 0 : index
    %c0_6 = arith.constant 0 : index
    %7 = vector.load %arg4[%c0_5, %c0_6] : memref<128x128xf32, #tpu.memory_space<vmem>>, vector<128x128xf32>
    %c0_7 = arith.constant 0 : index
    %c0_8 = arith.constant 0 : index
    %8 = vector.load %arg5[%c0_7, %c0_8] : memref<1x128xf32, #tpu.memory_space<vmem>>, vector<1x128xf32>
    %9 = vector.broadcast %8 : vector<1x128xf32> to vector<128x128xf32>
    %10 = arith.mulf %7, %9 : vector<128x128xf32>
    %11 = arith.addf %6, %10 : vector<128x128xf32>
    %c0_9 = arith.constant 0 : index
    %c0_10 = arith.constant 0 : index
    %12 = vector.load %arg6[%c0_9, %c0_10] : memref<1x128xf32, #tpu.memory_space<vmem>>, vector<1x128xf32>
    %13 = vector.broadcast %12 : vector<1x128xf32> to vector<128x128xf32>
    %14 = arith.addf %11, %13 : vector<128x128xf32>
    %cst = arith.constant 0.000000e+00 : f32
    %15 = vector.broadcast %cst : f32 to vector<128x128xf32>
    %16 = arith.maximumf %14, %15 : vector<128x128xf32>
    %c0_11 = arith.constant 0 : index
    %c0_12 = arith.constant 0 : index
    %17 = vector.load %arg7[%c0_11, %c0_12] : memref<128x128xf32, #tpu.memory_space<vmem>>, vector<128x128xf32>
    tpu.vector_store %arg7[%c0_11, %c0_12], %16 {strides = array<i32>} : memref<128x128xf32, #tpu.memory_space<vmem>>, vector<128x128xf32>,
    return
  }
  func.func @transform_0(%arg0: i32) -> (i32, i32) {
    %c0_i32 = arith.constant 0 : i32
    %c0_i32_0 = arith.constant 0 : i32
    return %arg0, %c0_i32 : i32, i32
  }
  func.func @transform_1(%arg0: i32) -> (i32, i32) {
    %c0_i32 = arith.constant 0 : i32
    %c0_i32_0 = arith.constant 0 : i32
    %c0_i32_1 = arith.constant 0 : i32
    return %c0_i32, %c0_i32_0 : i32, i32
  }
  func.func @transform_2(%arg0: i32) -> (i32, i32) {
    %c0_i32 = arith.constant 0 : i32
    %c0_i32_0 = arith.constant 0 : i32
    %c0_i32_1 = arith.constant 0 : i32
    return %c0_i32, %c0_i32_0 : i32, i32
  }
  func.func @transform_3(%arg0: i32) -> (i32, i32) {
    %c0_i32 = arith.constant 0 : i32
    %c0_i32_0 = arith.constant 0 : i32
    return %arg0, %c0_i32 : i32, i32
  }
  func.func @transform_4(%arg0: i32) -> (i32, i32) {
    %c0_i32 = arith.constant 0 : i32
    %c0_i32_0 = arith.constant 0 : i32
    %c0_i32_1 = arith.constant 0 : i32
    return %c0_i32, %c0_i32_0 : i32, i32
  }
  func.func @transform_5(%arg0: i32) -> (i32, i32) {
    %c0_i32 = arith.constant 0 : i32
    %c0_i32_0 = arith.constant 0 : i32
    %c0_i32_1 = arith.constant 0 : i32
    return %c0_i32, %c0_i32_0 : i32, i32
  }
  func.func @transform_6(%arg0: i32) -> (i32, i32) {
    %c0_i32 = arith.constant 0 : i32
    %c0_i32_0 = arith.constant 0 : i32
    return %arg0, %c0_i32 : i32, i32
  }
}

</mosaic_0001>

<llo_original>
// kernel: residual_block_forward.6
$region0: #{residual_block_forward.6}
  #allocation0 [shape = 'u32[]', space=smem, size = 0x4, offset = 0x4, fixed_abs, tag = 'smem constant byte address 0x4 - core index']
  #allocation1 [shape = 'u32[144,128]{1,0:T(1,128)}', space=vmem, size = 0x12000, scoped, tag = 'internal scratch']
  %s0 = inlined_call_operand.vmem [shape: f32[128,128], index: 0, kind: input, shape index: {}]
  %s1 = inlined_call_operand.vmem [shape: f32[1,128], index: 1, kind: input, shape index: {}]
  %s2 = inlined_call_operand.vmem [shape: f32[1,128], index: 2, kind: input, shape index: {}]
  %s3 = inlined_call_operand.vmem [shape: f32[128,128], index: 3, kind: output, shape index: {}]
  %s4 = sld [smem:[#allocation0]]
  $region22: #{residual_block_forward.6} parent=0
    _
  %s6 = ssub.s32 1, %s4
  %s7 = scalar_select 0, %s6, %s4
  // Predicated region
  $region2: #{residual_block_forward.6} parent=0 // pred_check
    _
  $region3: #{residual_block_forward.6} parent=0 // pred_check_branch
    %9 = sbr.rel (0) target = $region5
  $region4: #{residual_block_forward.6} parent=0 // pred_region
    _
  $region5: #{residual_block_forward.6} parent=0 // pred_fallthru
    _
  // Predicated region
  $region6: #{residual_block_forward.6} parent=0 // pred_check
    _
  $region7: #{residual_block_forward.6} parent=0 // pred_check_branch
    %11 = sbr.rel (0) target = $region9
  $region8: #{residual_block_forward.6} parent=0 // pred_region
    _
  $region9: #{residual_block_forward.6} parent=0 // pred_fallthru
    _
  // Predicated region
  $region10: #{residual_block_forward.6} parent=0 // pred_check
    _
  $region11: #{residual_block_forward.6} parent=0 // pred_check_branch
    %13 = sbr.rel (0) target = $region13
  $region12: #{residual_block_forward.6} parent=0 // pred_region
    _
  $region13: #{residual_block_forward.6} parent=0 // pred_fallthru
    _
  %v14 = vld [vmem:[%s0] sm:$0xff]
  %v15 = vld [vmem:[%s0 + $0x8] sm:$0xff]
  %v16 = vld [vmem:[%s0 + $0x10] sm:$0xff]
  %v17 = vld [vmem:[%s0 + $0x18] sm:$0xff]
  %v18 = vld [vmem:[%s0 + $0x20] sm:$0xff]
  %v19 = vld [vmem:[%s0 + $0x28] sm:$0xff]
  %v20 = vld [vmem:[%s0 + $0x30] sm:$0xff]
  %v21 = vld [vmem:[%s0 + $0x38] sm:$0xff]
  %v22 = vld [vmem:[%s0 + $0x40] sm:$0xff]
  %v23 = vld [vmem:[%s0 + $0x48] sm:$0xff]
  %v24 = vld [vmem:[%s0 + $0x50] sm:$0xff]
  %v25 = vld [vmem:[%s0 + $0x58] sm:$0xff]
  %v26 = vld [vmem:[%s0 + $0x60] sm:$0xff]
  %v27 = vld [vmem:[%s0 + $0x68] sm:$0xff]
  %v28 = vld [vmem:[%s0 + $0x70] sm:$0xff]
  %v29 = vld [vmem:[%s0 + $0x78] sm:$0xff]
  %v30 = vld [vmem:[%s1] sm:$0x1]
  %v32 = vlaneseq
  %v33 = vshrl.u32 %v32, 7
  %v34 = vsub.s32 0, %v33
  %v35 = vrot.slane %v30, %v34
  %v37 = vmul.f32 %v14, %v35
  %v38 = vmul.f32 %v15, %v35
  %v39 = vmul.f32 %v16, %v35
  %v40 = vmul.f32 %v17, %v35
  %v41 = vmul.f32 %v18, %v35
  %v42 = vmul.f32 %v19, %v35
  %v43 = vmul.f32 %v20, %v35
  %v44 = vmul.f32 %v21, %v35
  %v45 = vmul.f32 %v22, %v35
  %v46 = vmul.f32 %v23, %v35
  %v47 = vmul.f32 %v24, %v35
  %v48 = vmul.f32 %v25, %v35
  %v49 = vmul.f32 %v26, %v35
  %v50 = vmul.f32 %v27, %v35
  %v51 = vmul.f32 %v28, %v35
  %v52 = vmul.f32 %v29, %v35
  %v53 = vld [vmem:[%s2] sm:$0x1]
  %v55 = vlaneseq
  %v56 = vshrl.u32 %v55, 7
  %v57 = vsub.s32 0, %v56
  %v58 = vrot.slane %v53, %v57
  %v60 = vadd.f32 %v37, %v58
  %v61 = vadd.f32 %v38, %v58
  %v62 = vadd.f32 %v39, %v58
  %v63 = vadd.f32 %v40, %v58
  %v64 = vadd.f32 %v41, %v58
  %v65 = vadd.f32 %v42, %v58
  %v66 = vadd.f32 %v43, %v58
  %v67 = vadd.f32 %v44, %v58
  %v68 = vadd.f32 %v45, %v58
  %v69 = vadd.f32 %v46, %v58
  %v70 = vadd.f32 %v47, %v58
  %v71 = vadd.f32 %v48, %v58
  %v72 = vadd.f32 %v49, %v58
  %v73 = vadd.f32 %v50, %v58
  %v74 = vadd.f32 %v51, %v58
  %v75 = vadd.f32 %v52, %v58
  %v76 = vmax.f32 %v60, 0.0
  %v77 = vmax.f32 %v61, 0.0
  %v78 = vmax.f32 %v62, 0.0
  %v79 = vmax.f32 %v63, 0.0
  %v80 = vmax.f32 %v64, 0.0
  %v81 = vmax.f32 %v65, 0.0
  %v82 = vmax.f32 %v66, 0.0
  %v83 = vmax.f32 %v67, 0.0
  %v84 = vmax.f32 %v68, 0.0
  %v85 = vmax.f32 %v69, 0.0
  %v86 = vmax.f32 %v70, 0.0
  %v87 = vmax.f32 %v71, 0.0
  %v88 = vmax.f32 %v72, 0.0
  %v89 = vmax.f32 %v73, 0.0
  %v90 = vmax.f32 %v74, 0.0
  %v91 = vmax.f32 %v75, 0.0
  %92 = vst [vmem:[%s3] sm:$0xff] %v76
  %93 = vst [vmem:[%s3 + $0x8] sm:$0xff] %v77
  %94 = vst [vmem:[%s3 + $0x10] sm:$0xff] %v78
  %95 = vst [vmem:[%s3 + $0x18] sm:$0xff] %v79
  %96 = vst [vmem:[%s3 + $0x20] sm:$0xff] %v80
  %97 = vst [vmem:[%s3 + $0x28] sm:$0xff] %v81
  %98 = vst [vmem:[%s3 + $0x30] sm:$0xff] %v82
  %99 = vst [vmem:[%s3 + $0x38] sm:$0xff] %v83
  %100 = vst [vmem:[%s3 + $0x40] sm:$0xff] %v84
  %101 = vst [vmem:[%s3 + $0x48] sm:$0xff] %v85
  %102 = vst [vmem:[%s3 + $0x50] sm:$0xff] %v86
  %103 = vst [vmem:[%s3 + $0x58] sm:$0xff] %v87
  %104 = vst [vmem:[%s3 + $0x60] sm:$0xff] %v88
  %105 = vst [vmem:[%s3 + $0x68] sm:$0xff] %v89
  %106 = vst [vmem:[%s3 + $0x70] sm:$0xff] %v90
  %107 = vst [vmem:[%s3 + $0x78] sm:$0xff] %v91
  // Predicated region
  $region14: #{residual_block_forward.6} parent=0 // pred_check
    _
  $region15: #{residual_block_forward.6} parent=0 // pred_check_branch
    %109 = sbr.rel (0) target = $region17
  $region16: #{residual_block_forward.6} parent=0 // pred_region
    _
  $region17: #{residual_block_forward.6} parent=0 // pred_fallthru
    _
  // Predicated region
  $region18: #{residual_block_forward.6} parent=0 // pred_check
    _
  $region19: #{residual_block_forward.6} parent=0 // pred_check_branch
    %111 = sbr.rel (0) target = $region21
  $region20: #{residual_block_forward.6} parent=0 // pred_region
    _
  $region21: #{residual_block_forward.6} parent=0 // pred_fallthru
    _

// kernel: residual_block_forward.5
$region0: #{residual_block_forward.5}
  #allocation0 [shape = 'u32[]', space=smem, size = 0x4, offset = 0x4, fixed_abs, tag = 'smem constant byte address 0x4 - core index']
  #allocation1 [shape = 'u32[144,128]{1,0:T(1,128)}', space=vmem, size = 0x12000, scoped, tag = 'internal scratch']
  #allocation2 [shape = 'f32[128,128]{1,0:T(8,128)}', space=vmem, size = 0x10000, scoped, tag = 'scratch operand']
  %s0 = inlined_call_operand.vmem [shape: bf16[128,128], index: 0, kind: input, shape index: {}]
  %s1 = inlined_call_operand.vmem [shape: bf16[128,128], index: 1, kind: input, shape index: {}]
  %s2 = inlined_call_operand.vmem [shape: f32[128,128], index: 2, kind: output, shape index: {0}]
  %s3 = inlined_call_operand.vmem [shape: f32[1,128], index: 3, kind: output, shape index: {1}]
  %s4 = inlined_call_operand.vmem [shape: f32[1,128], index: 4, kind: output, shape index: {2}]
  %5 = xla_tuple %s2, %s3, %s4
  %s6 = sld [smem:[#allocation0]]
  $region46: #{residual_block_forward.5} parent=0
    _
  %s8 = ssub.s32 1, %s6
  %s9 = scalar_select 0, %s8, %s6
  // Predicated region
  $region2: #{residual_block_forward.5} parent=0 // pred_check
    _
  $region3: #{residual_block_forward.5} parent=0 // pred_check_branch
    %11 = sbr.rel (0) target = $region5
  $region4: #{residual_block_forward.5} parent=0 // pred_region
    _
  $region5: #{residual_block_forward.5} parent=0 // pred_fallthru
    _
  // Predicated region
  $region6: #{residual_block_forward.5} parent=0 // pred_check
    _
  $region7: #{residual_block_forward.5} parent=0 // pred_check_branch
    %13 = sbr.rel (0) target = $region9
  $region8: #{residual_block_forward.5} parent=0 // pred_region
    _
  $region9: #{residual_block_forward.5} parent=0 // pred_fallthru
    _
  %p15 = scmp.eq.s32.totalorder 0, 0
  // Predicated region
  $region10: #{residual_block_forward.5} parent=0 // pred_check
    %p16 = pneg %p15
  $region11: #{residual_block_forward.5} parent=0 // pred_check_branch
    %18 = sbr.rel (%p16) target = $region13
  $region12: #{residual_block_forward.5} parent=0 // pred_region
    %19 = vst [vmem:[#allocation2] sm:$0xff] 0.0
    %20 = vst [vmem:[#allocation2 + $0x8] sm:$0xff] 0.0
    %21 = vst [vmem:[#allocation2 + $0x10] sm:$0xff] 0.0
    %22 = vst [vmem:[#allocation2 + $0x18] sm:$0xff] 0.0
    %23 = vst [vmem:[#allocation2 + $0x20] sm:$0xff] 0.0
    %24 = vst [vmem:[#allocation2 + $0x28] sm:$0xff] 0.0
    %25 = vst [vmem:[#allocation2 + $0x30] sm:$0xff] 0.0
    %26 = vst [vmem:[#allocation2 + $0x38] sm:$0xff] 0.0
    %27 = vst [vmem:[#allocation2 + $0x40] sm:$0xff] 0.0
    %28 = vst [vmem:[#allocation2 + $0x48] sm:$0xff] 0.0
    %29 = vst [vmem:[#allocation2 + $0x50] sm:$0xff] 0.0
    %30 = vst [vmem:[#allocation2 + $0x58] sm:$0xff] 0.0
    %31 = vst [vmem:[#allocation2 + $0x60] sm:$0xff] 0.0
    %32 = vst [vmem:[#allocation2 + $0x68] sm:$0xff] 0.0
    %33 = vst [vmem:[#allocation2 + $0x70] sm:$0xff] 0.0
    %34 = vst [vmem:[#allocation2 + $0x78] sm:$0xff] 0.0
  $region13: #{residual_block_forward.5} parent=0 // pred_fallthru
    _
  %p35 = scmp.eq.s32.totalorder 0, 0
  %p36 = pnand %p35, %p15
  %p37 = pneg %p36
  // Predicated region
  $region14: #{residual_block_forward.5} parent=0 // pred_check
    _
  $region15: #{residual_block_forward.5} parent=0 // pred_check_branch
    %39 = sbr.rel (%p36) target = $region17
  $region16: #{residual_block_forward.5} parent=0 // pred_region
    %40 = vst [vmem:[%s3] sm:$0x1] 0.0
    %41 = vst [vmem:[%s4] sm:$0x1] 0.0
  $region17: #{residual_block_forward.5} parent=0 // pred_fallthru
    _
  %v42 = vld [vmem:[#allocation2] sm:$0xff]
  %v43 = vld [vmem:[#allocation2 + $0x8] sm:$0xff]
  %v44 = vld [vmem:[#allocation2 + $0x10] sm:$0xff]
  %v45 = vld [vmem:[#allocation2 + $0x18] sm:$0xff]
  %v46 = vld [vmem:[#allocation2 + $0x20] sm:$0xff]
  %v47 = vld [vmem:[#allocation2 + $0x28] sm:$0xff]
  %v48 = vld [vmem:[#allocation2 + $0x30] sm:$0xff]
  %v49 = vld [vmem:[#allocation2 + $0x38] sm:$0xff]
  %v50 = vld [vmem:[#allocation2 + $0x40] sm:$0xff]
  %v51 = vld [vmem:[#allocation2 + $0x48] sm:$0xff]
  %v52 = vld [vmem:[#allocation2 + $0x50] sm:$0xff]
  %v53 = vld [vmem:[#allocation2 + $0x58] sm:$0xff]
  %v54 = vld [vmem:[#allocation2 + $0x60] sm:$0xff]
  %v55 = vld [vmem:[#allocation2 + $0x68] sm:$0xff]
  %v56 = vld [vmem:[#allocation2 + $0x70] sm:$0xff]
  %v57 = vld [vmem:[#allocation2 + $0x78] sm:$0xff]
  %v58 = vld [vmem:[%s0] sm:$0xf]
  %v59 = vld [vmem:[%s0 + $0x4] sm:$0xf]
  %v60 = vld [vmem:[%s0 + $0x8] sm:$0xf]
  %v61 = vld [vmem:[%s0 + $0xc] sm:$0xf]
  %v62 = vld [vmem:[%s0 + $0x10] sm:$0xf]
  %v63 = vld [vmem:[%s0 + $0x14] sm:$0xf]
  %v64 = vld [vmem:[%s0 + $0x18] sm:$0xf]
  %v65 = vld [vmem:[%s0 + $0x1c] sm:$0xf]
  %v66 = vld [vmem:[%s0 + $0x20] sm:$0xf]
  %v67 = vld [vmem:[%s0 + $0x24] sm:$0xf]
  %v68 = vld [vmem:[%s0 + $0x28] sm:$0xf]
  %v69 = vld [vmem:[%s0 + $0x2c] sm:$0xf]
  %v70 = vld [vmem:[%s0 + $0x30] sm:$0xf]
  %v71 = vld [vmem:[%s0 + $0x34] sm:$0xf]
  %v72 = vld [vmem:[%s0 + $0x38] sm:$0xf]
  %v73 = vld [vmem:[%s0 + $0x3c] sm:$0xf]
  %v74 = vld [vmem:[%s1] sm:$0xf]
  %v75 = vld [vmem:[%s1 + $0x4] sm:$0xf]
  %v76 = vld [vmem:[%s1 + $0x8] sm:$0xf]
  %v77 = vld [vmem:[%s1 + $0xc] sm:$0xf]
  %v78 = vld [vmem:[%s1 + $0x10] sm:$0xf]
  %v79 = vld [vmem:[%s1 + $0x14] sm:$0xf]
  %v80 = vld [vmem:[%s1 + $0x18] sm:$0xf]
  %v81 = vld [vmem:[%s1 + $0x1c] sm:$0xf]
  %v82 = vld [vmem:[%s1 + $0x20] sm:$0xf]
  %v83 = vld [vmem:[%s1 + $0x24] sm:$0xf]
  %v84 = vld [vmem:[%s1 + $0x28] sm:$0xf]
  %v85 = vld [vmem:[%s1 + $0x2c] sm:$0xf]
  %v86 = vld [vmem:[%s1 + $0x30] sm:$0xf]
  %v87 = vld [vmem:[%s1 + $0x34] sm:$0xf]
  %v88 = vld [vmem:[%s1 + $0x38] sm:$0xf]
  %v89 = vld [vmem:[%s1 + $0x3c] sm:$0xf]
  %v106 = vunpack.c.l.b16 %v58
  %v107 = vunpack.c.l.b16 %v59
  %v108 = vunpack.c.l.b16 %v60
  %v109 = vunpack.c.l.b16 %v61
  %v110 = vunpack.c.l.b16 %v62
  %v111 = vunpack.c.l.b16 %v63
  %v112 = vunpack.c.l.b16 %v64
  %v113 = vunpack.c.l.b16 %v65
  %v114 = vunpack.c.l.b16 %v66
  %v115 = vunpack.c.l.b16 %v67
  %v116 = vunpack.c.l.b16 %v68
  %v117 = vunpack.c.l.b16 %v69
  %v118 = vunpack.c.l.b16 %v70
  %v119 = vunpack.c.l.b16 %v71
  %v120 = vunpack.c.l.b16 %v72
  %v121 = vunpack.c.l.b16 %v73
  %v122 = vpack.c.b16 %v107, %v106
  %v123 = vpack.c.b16 %v109, %v108
  %v124 = vpack.c.b16 %v111, %v110
  %v125 = vpack.c.b16 %v113, %v112
  %v126 = vpack.c.b16 %v115, %v114
  %v127 = vpack.c.b16 %v117, %v116
  %v128 = vpack.c.b16 %v119, %v118
  %v129 = vpack.c.b16 %v121, %v120
  %v154 = vunpack.c.l.b16 %v74
  %v155 = vunpack.c.l.b16 %v75
  %v156 = vunpack.c.l.b16 %v76
  %v157 = vunpack.c.l.b16 %v77
  %v158 = vunpack.c.l.b16 %v78
  %v159 = vunpack.c.l.b16 %v79
  %v160 = vunpack.c.l.b16 %v80
  %v161 = vunpack.c.l.b16 %v81
  %v162 = vunpack.c.l.b16 %v82
  %v163 = vunpack.c.l.b16 %v83
  %v164 = vunpack.c.l.b16 %v84
  %v165 = vunpack.c.l.b16 %v85
  %v166 = vunpack.c.l.b16 %v86
  %v167 = vunpack.c.l.b16 %v87
  %v168 = vunpack.c.l.b16 %v88
  %v169 = vunpack.c.l.b16 %v89
  %v170 = vpack.c.b16 %v155, %v154
  %v171 = vpack.c.b16 %v157, %v156
  %v172 = vpack.c.b16 %v159, %v158
  %v173 = vpack.c.b16 %v161, %v160
  %v174 = vpack.c.b16 %v163, %v162
  %v175 = vpack.c.b16 %v165, %v164
  %v176 = vpack.c.b16 %v167, %v166
  %v177 = vpack.c.b16 %v169, %v168
  %186 = vmatprep.subr.bf16.mxu0 0
  %187 = vmatpush1.bf16.msra.mxu0 %v170
  %188 = vmatprep.subr.bf16.mxu0 0
  %189 = vmatpush1.bf16.msra.mxu0 %v171
  %190 = vmatprep.subr.bf16.mxu0 0
  %191 = vmatpush1.bf16.msra.mxu0 %v172
  %192 = vmatprep.subr.bf16.mxu0 0
  %193 = vmatpush1.bf16.msra.mxu0 %v173
  %194 = vmatprep.subr.bf16.mxu0 0
  %195 = vmatpush1.bf16.msra.mxu0 %v174
  %196 = vmatprep.subr.bf16.mxu0 0
  %197 = vmatpush1.bf16.msra.mxu0 %v175
  %198 = vmatprep.subr.bf16.mxu0 0
  %199 = vmatpush1.bf16.msra.mxu0 %v176
  %200 = vmatprep.subr.bf16.mxu0 0
  %201 = vmatpush1.bf16.msra.mxu0 %v177
  %202 = vmatprep.subr.bf16.mxu0 0
  %203 = vmatpush1.bf16.msra.mxu0 0
  %204 = vmatprep.subr.bf16.mxu0 0
  %205 = vmatpush1.bf16.msra.mxu0 0
  %206 = vmatprep.subr.bf16.mxu0 0
  %207 = vmatpush1.bf16.msra.mxu0 0
  %208 = vmatprep.subr.bf16.mxu0 0
  %209 = vmatpush1.bf16.msra.mxu0 0
  %210 = vmatprep.subr.bf16.mxu0 0
  %211 = vmatpush1.bf16.msra.mxu0 0
  %212 = vmatprep.subr.bf16.mxu0 0
  %213 = vmatpush1.bf16.msra.mxu0 0
  %214 = vmatprep.subr.bf16.mxu0 0
  %215 = vmatpush1.bf16.msra.mxu0 0
  %216 = vmatprep.subr.bf16.mxu0 0
  %217 = vmatpush1.bf16.msra.mxu0 0
  %218 = vmatprep.mubr.bf16.mxu0 0
  %219 = vmatmul.mubr.bf16.gmra.mrb[0].mxu0 %v122
  %v220 = vpop.f32.mrb[0].mxu0
  %v221 = vadd.f32 0.0, %v220
  %v222 = vpop.f32.mrb[0].mxu0
  %v223 = vpop.f32.mrb[0].mxu0
  %v224 = vadd.f32 0.0, %v223
  %v225 = vpop.f32.mrb[0].mxu0
  %226 = vmatprep.mubr.bf16.mxu0 0
  %227 = vmatmul.mubr.bf16.gmra.mrb[0].mxu0 %v123
  %v228 = vpop.f32.mrb[0].mxu0
  %v229 = vadd.f32 0.0, %v228
  %v230 = vpop.f32.mrb[0].mxu0
  %v231 = vpop.f32.mrb[0].mxu0
  %v232 = vadd.f32 0.0, %v231
  %v233 = vpop.f32.mrb[0].mxu0
  %234 = vmatprep.mubr.bf16.mxu0 0
  %235 = vmatmul.mubr.bf16.gmra.mrb[0].mxu0 %v124
  %v236 = vpop.f32.mrb[0].mxu0
  %v237 = vadd.f32 0.0, %v236
  %v238 = vpop.f32.mrb[0].mxu0
  %v239 = vpop.f32.mrb[0].mxu0
  %v240 = vadd.f32 0.0, %v239
  %v241 = vpop.f32.mrb[0].mxu0
  %242 = vmatprep.mubr.bf16.mxu0 0
  %243 = vmatmul.mubr.bf16.gmra.mrb[0].mxu0 %v125
  %v244 = vpop.f32.mrb[0].mxu0
  %v245 = vadd.f32 0.0, %v244
  %v246 = vpop.f32.mrb[0].mxu0
  %v247 = vpop.f32.mrb[0].mxu0
  %v248 = vadd.f32 0.0, %v247
  %v249 = vpop.f32.mrb[0].mxu0
  %250 = vmatprep.mubr.bf16.mxu0 0
  %251 = vmatmul.mubr.bf16.gmra.mrb[0].mxu0 %v126
  %v252 = vpop.f32.mrb[0].mxu0
  %v253 = vadd.f32 0.0, %v252
  %v254 = vpop.f32.mrb[0].mxu0
  %v255 = vpop.f32.mrb[0].mxu0
  %v256 = vadd.f32 0.0, %v255
  %v257 = vpop.f32.mrb[0].mxu0
  %258 = vmatprep.mubr.bf16.mxu0 0
  %259 = vmatmul.mubr.bf16.gmra.mrb[0].mxu0 %v127
  %v260 = vpop.f32.mrb[0].mxu0
  %v261 = vadd.f32 0.0, %v260
  %v262 = vpop.f32.mrb[0].mxu0
  %v263 = vpop.f32.mrb[0].mxu0
  %v264 = vadd.f32 0.0, %v263
  %v265 = vpop.f32.mrb[0].mxu0
  %266 = vmatprep.mubr.bf16.mxu0 0
  %267 = vmatmul.mubr.bf16.gmra.mrb[0].mxu0 %v128
  %v268 = vpop.f32.mrb[0].mxu0
  %v269 = vadd.f32 0.0, %v268
  %v270 = vpop.f32.mrb[0].mxu0
  %v271 = vpop.f32.mrb[0].mxu0
  %v272 = vadd.f32 0.0, %v271
  %v273 = vpop.f32.mrb[0].mxu0
  %274 = vmatprep.mubr.bf16.mxu0 0
  %275 = vmatmul.mubr.bf16.gmra.mrb[0].mxu0 %v129
  %v276 = vpop.f32.mrb[0].mxu0
  %v277 = vadd.f32 0.0, %v276
  %v278 = vpop.f32.mrb[0].mxu0
  %v279 = vpop.f32.mrb[0].mxu0
  %v280 = vadd.f32 0.0, %v279
  %v281 = vpop.f32.mrb[0].mxu0
  %282 = vdwg.mxu0
  %v283 = vadd.f32 %v42, %v221
  %v284 = vadd.f32 %v43, %v224
  %v285 = vadd.f32 %v44, %v229
  %v286 = vadd.f32 %v45, %v232
  %v287 = vadd.f32 %v46, %v237
  %v288 = vadd.f32 %v47, %v240
  %v289 = vadd.f32 %v48, %v245
  %v290 = vadd.f32 %v49, %v248
  %v291 = vadd.f32 %v50, %v253
  %v292 = vadd.f32 %v51, %v256
  %v293 = vadd.f32 %v52, %v261
  %v294 = vadd.f32 %v53, %v264
  %v295 = vadd.f32 %v54, %v269
  %v296 = vadd.f32 %v55, %v272
  %v297 = vadd.f32 %v56, %v277
  %v298 = vadd.f32 %v57, %v280
  %299 = vst [vmem:[#allocation2] sm:$0xff] %v283
  %300 = vst [vmem:[#allocation2 + $0x8] sm:$0xff] %v284
  %301 = vst [vmem:[#allocation2 + $0x10] sm:$0xff] %v285
  %302 = vst [vmem:[#allocation2 + $0x18] sm:$0xff] %v286
  %303 = vst [vmem:[#allocation2 + $0x20] sm:$0xff] %v287
  %304 = vst [vmem:[#allocation2 + $0x28] sm:$0xff] %v288
  %305 = vst [vmem:[#allocation2 + $0x30] sm:$0xff] %v289
  %306 = vst [vmem:[#allocation2 + $0x38] sm:$0xff] %v290
  %307 = vst [vmem:[#allocation2 + $0x40] sm:$0xff] %v291
  %308 = vst [vmem:[#allocation2 + $0x48] sm:$0xff] %v292
  %309 = vst [vmem:[#allocation2 + $0x50] sm:$0xff] %v293
  %310 = vst [vmem:[#allocation2 + $0x58] sm:$0xff] %v294
  %311 = vst [vmem:[#allocation2 + $0x60] sm:$0xff] %v295
  %312 = vst [vmem:[#allocation2 + $0x68] sm:$0xff] %v296
  %313 = vst [vmem:[#allocation2 + $0x70] sm:$0xff] %v297
  %314 = vst [vmem:[#allocation2 + $0x78] sm:$0xff] %v298
  // Predicated region
  $region18: #{residual_block_forward.5} parent=0 // pred_check
    %p315 = pneg %p15
  $region19: #{residual_block_forward.5} parent=0 // pred_check_branch
    %317 = sbr.rel (%p315) target = $region21
  $region20: #{residual_block_forward.5} parent=0 // pred_region
    %v318 = vld [vmem:[#allocation2] sm:$0xff]
    %v319 = vld [vmem:[#allocation2 + $0x8] sm:$0xff]
    %v320 = vld [vmem:[#allocation2 + $0x10] sm:$0xff]
    %v321 = vld [vmem:[#allocation2 + $0x18] sm:$0xff]
    %v322 = vld [vmem:[#allocation2 + $0x20] sm:$0xff]
    %v323 = vld [vmem:[#allocation2 + $0x28] sm:$0xff]
    %v324 = vld [vmem:[#allocation2 + $0x30] sm:$0xff]
    %v325 = vld [vmem:[#allocation2 + $0x38] sm:$0xff]
    %v326 = vld [vmem:[#allocation2 + $0x40] sm:$0xff]
    %v327 = vld [vmem:[#allocation2 + $0x48] sm:$0xff]
    %v328 = vld [vmem:[#allocation2 + $0x50] sm:$0xff]
    %v329 = vld [vmem:[#allocation2 + $0x58] sm:$0xff]
    %v330 = vld [vmem:[#allocation2 + $0x60] sm:$0xff]
    %v331 = vld [vmem:[#allocation2 + $0x68] sm:$0xff]
    %v332 = vld [vmem:[#allocation2 + $0x70] sm:$0xff]
    %v333 = vld [vmem:[#allocation2 + $0x78] sm:$0xff]
    %334 = vst [vmem:[%s2] sm:$0xff] %v318
    %335 = vst [vmem:[%s2 + $0x8] sm:$0xff] %v319
    %336 = vst [vmem:[%s2 + $0x10] sm:$0xff] %v320
    %337 = vst [vmem:[%s2 + $0x18] sm:$0xff] %v321
    %338 = vst [vmem:[%s2 + $0x20] sm:$0xff] %v322
    %339 = vst [vmem:[%s2 + $0x28] sm:$0xff] %v323
    %340 = vst [vmem:[%s2 + $0x30] sm:$0xff] %v324
    %341 = vst [vmem:[%s2 + $0x38] sm:$0xff] %v325
    %342 = vst [vmem:[%s2 + $0x40] sm:$0xff] %v326
    %343 = vst [vmem:[%s2 + $0x48] sm:$0xff] %v327
    %344 = vst [vmem:[%s2 + $0x50] sm:$0xff] %v328
    %345 = vst [vmem:[%s2 + $0x58] sm:$0xff] %v329
    %346 = vst [vmem:[%s2 + $0x60] sm:$0xff] %v330
    %347 = vst [vmem:[%s2 + $0x68] sm:$0xff] %v331
    %348 = vst [vmem:[%s2 + $0x70] sm:$0xff] %v332
    %349 = vst [vmem:[%s2 + $0x78] sm:$0xff] %v333
    %v350 = vld [vmem:[%s3] sm:$0x1]
    %v351 = vadd.f32 %v318, %v319
    %v352 = vadd.f32 %v351, %v320
    %v353 = vadd.f32 %v352, %v321
    %v354 = vadd.f32 %v353, %v322
    %v355 = vadd.f32 %v354, %v323
    %v356 = vadd.f32 %v355, %v324
    %v357 = vadd.f32 %v356, %v325
    %v358 = vadd.f32 %v357, %v326
    %v359 = vadd.f32 %v358, %v327
    %v360 = vadd.f32 %v359, %v328
    %v361 = vadd.f32 %v360, %v329
    %v362 = vadd.f32 %v361, %v330
    %v363 = vadd.f32 %v362, %v331
    %v364 = vadd.f32 %v363, %v332
    %v365 = vadd.f32 %v364, %v333
    %v366 = vrot.slane %v365, 4
    %v367 = vadd.f32 %v365, %v366
    %v368 = vrot.slane %v367, 2
    %v369 = vadd.f32 %v367, %v368
    %v370 = vrot.slane %v369, 1
    %v371 = vadd.f32 %v369, %v370
    %v372 = vadd.f32 %v350, %v371
    %373 = vst [vmem:[%s3] sm:$0x1] %v372
    %v374 = vld [vmem:[%s4] sm:$0x1]
    %v375 = vmul.f32 %v318, %v318
    %v376 = vmul.f32 %v319, %v319
    %v377 = vmul.f32 %v320, %v320
    %v378 = vmul.f32 %v321, %v321
    %v379 = vmul.f32 %v322, %v322
    %v380 = vmul.f32 %v323, %v323
    %v381 = vmul.f32 %v324, %v324
    %v382 = vmul.f32 %v325, %v325
    %v383 = vmul.f32 %v326, %v326
    %v384 = vmul.f32 %v327, %v327
    %v385 = vmul.f32 %v328, %v328
    %v386 = vmul.f32 %v329, %v329
    %v387 = vmul.f32 %v330, %v330
    %v388 = vmul.f32 %v331, %v331
    %v389 = vmul.f32 %v332, %v332
    %v390 = vmul.f32 %v333, %v333
    %v391 = vadd.f32 %v375, %v376
    %v392 = vadd.f32 %v391, %v377
    %v393 = vadd.f32 %v392, %v378
    %v394 = vadd.f32 %v393, %v379
    %v395 = vadd.f32 %v394, %v380
    %v396 = vadd.f32 %v395, %v381
    %v397 = vadd.f32 %v396, %v382
    %v398 = vadd.f32 %v397, %v383
    %v399 = vadd.f32 %v398, %v384
    %v400 = vadd.f32 %v399, %v385
    %v401 = vadd.f32 %v400, %v386
    %v402 = vadd.f32 %v401, %v387
    %v403 = vadd.f32 %v402, %v388
    %v404 = vadd.f32 %v403, %v389
    %v405 = vadd.f32 %v404, %v390
    %v406 = vrot.slane %v405, 4
    %v407 = vadd.f32 %v405, %v406
    %v408 = vrot.slane %v407, 2
    %v409 = vadd.f32 %v407, %v408
    %v410 = vrot.slane %v409, 1
    %v411 = vadd.f32 %v409, %v410
    %v412 = vadd.f32 %v374, %v411
    %413 = vst [vmem:[%s4] sm:$0x1] %v412
  $region21: #{residual_block_forward.5} parent=0 // pred_fallthru
    _
  // Predicated region
  $region22: #{residual_block_forward.5} parent=0 // pred_check
    _
  $region23: #{residual_block_forward.5} parent=0 // pred_check_branch
    %415 = sbr.rel (0) target = $region25
  $region24: #{residual_block_forward.5} parent=0 // pred_region
    _
  $region25: #{residual_block_forward.5} parent=0 // pred_fallthru
    _
  // Predicated region
  $region26: #{residual_block_forward.5} parent=0 // pred_check
    _
  $region27: #{residual_block_forward.5} parent=0 // pred_check_branch
    %417 = sbr.rel (0) target = $region29
  $region28: #{residual_block_forward.5} parent=0 // pred_region
    _
  $region29: #{residual_block_forward.5} parent=0 // pred_fallthru
    _
  // Predicated region
  $region30: #{residual_block_forward.5} parent=0 // pred_check
    _
  $region31: #{residual_block_forward.5} parent=0 // pred_check_branch
    %419 = sbr.rel (0) target = $region33
  $region32: #{residual_block_forward.5} parent=0 // pred_region
    _
  $region33: #{residual_block_forward.5} parent=0 // pred_fallthru
    _
  // Predicated region
  $region34: #{residual_block_forward.5} parent=0 // pred_check
    _
  $region35: #{residual_block_forward.5} parent=0 // pred_check_branch
    %421 = sbr.rel (0) target = $region37
  $region36: #{residual_block_forward.5} parent=0 // pred_region
    _
  $region37: #{residual_block_forward.5} parent=0 // pred_fallthru
    _
  // Predicated region
  $region38: #{residual_block_forward.5} parent=0 // pred_check
    _
  $region39: #{residual_block_forward.5} parent=0 // pred_check_branch
    %423 = sbr.rel (0) target = $region41
  $region40: #{residual_block_forward.5} parent=0 // pred_region
    _
  $region41: #{residual_block_forward.5} parent=0 // pred_fallthru
    _
  // Predicated region
  $region42: #{residual_block_forward.5} parent=0 // pred_check
    _
  $region43: #{residual_block_forward.5} parent=0 // pred_check_branch
    %425 = sbr.rel (0) target = $region45
  $region44: #{residual_block_forward.5} parent=0 // pred_region
    _
  $region45: #{residual_block_forward.5} parent=0 // pred_fallthru
    _

// kernel: residual_block_forward.9
$region0: #{residual_block_forward.9}
  #allocation0 [shape = 'u32[]', space=smem, size = 0x4, offset = 0x4, fixed_abs, tag = 'smem constant byte address 0x4 - core index']
  #allocation1 [shape = 'u32[144,128]{1,0:T(1,128)}', space=vmem, size = 0x12000, scoped, tag = 'internal scratch']
  %s0 = inlined_call_operand.vmem [shape: f32[128,128], index: 0, kind: input, shape index: {}]
  %s1 = inlined_call_operand.vmem [shape: f32[1,128], index: 1, kind: input, shape index: {}]
  %s2 = inlined_call_operand.vmem [shape: f32[1,128], index: 2, kind: input, shape index: {}]
  %s3 = inlined_call_operand.vmem [shape: f32[128,128], index: 3, kind: input, shape index: {}]
  %s4 = inlined_call_operand.vmem [shape: f32[1,128], index: 4, kind: input, shape index: {}]
  %s5 = inlined_call_operand.vmem [shape: f32[1,128], index: 5, kind: input, shape index: {}]
  %s6 = inlined_call_operand.vmem [shape: f32[128,128], index: 6, kind: output, shape index: {}]
  %s7 = sld [smem:[#allocation0]]
  $region34: #{residual_block_forward.9} parent=0
    _
  %s9 = ssub.s32 1, %s7
  %s10 = scalar_select 0, %s9, %s7
  // Predicated region
  $region2: #{residual_block_forward.9} parent=0 // pred_check
    _
  $region3: #{residual_block_forward.9} parent=0 // pred_check_branch
    %12 = sbr.rel (0) target = $region5
  $region4: #{residual_block_forward.9} parent=0 // pred_region
    _
  $region5: #{residual_block_forward.9} parent=0 // pred_fallthru
    _
  // Predicated region
  $region6: #{residual_block_forward.9} parent=0 // pred_check
    _
  $region7: #{residual_block_forward.9} parent=0 // pred_check_branch
    %14 = sbr.rel (0) target = $region9
  $region8: #{residual_block_forward.9} parent=0 // pred_region
    _
  $region9: #{residual_block_forward.9} parent=0 // pred_fallthru
    _
  // Predicated region
  $region10: #{residual_block_forward.9} parent=0 // pred_check
    _
  $region11: #{residual_block_forward.9} parent=0 // pred_check_branch
    %16 = sbr.rel (0) target = $region13
  $region12: #{residual_block_forward.9} parent=0 // pred_region
    _
  $region13: #{residual_block_forward.9} parent=0 // pred_fallthru
    _
  // Predicated region
  $region14: #{residual_block_forward.9} parent=0 // pred_check
    _
  $region15: #{residual_block_forward.9} parent=0 // pred_check_branch
    %18 = sbr.rel (0) target = $region17
  $region16: #{residual_block_forward.9} parent=0 // pred_region
    _
  $region17: #{residual_block_forward.9} parent=0 // pred_fallthru
    _
  // Predicated region
  $region18: #{residual_block_forward.9} parent=0 // pred_check
    _
  $region19: #{residual_block_forward.9} parent=0 // pred_check_branch
    %20 = sbr.rel (0) target = $region21
  $region20: #{residual_block_forward.9} parent=0 // pred_region
    _
  $region21: #{residual_block_forward.9} parent=0 // pred_fallthru
    _
  // Predicated region
  $region22: #{residual_block_forward.9} parent=0 // pred_check
    _
  $region23: #{residual_block_forward.9} parent=0 // pred_check_branch
    %22 = sbr.rel (0) target = $region25
  $region24: #{residual_block_forward.9} parent=0 // pred_region
    _
  $region25: #{residual_block_forward.9} parent=0 // pred_fallthru
    _
  %v23 = vld [vmem:[%s0] sm:$0xff]
  %v24 = vld [vmem:[%s0 + $0x8] sm:$0xff]
  %v25 = vld [vmem:[%s0 + $0x10] sm:$0xff]
  %v26 = vld [vmem:[%s0 + $0x18] sm:$0xff]
  %v27 = vld [vmem:[%s0 + $0x20] sm:$0xff]
  %v28 = vld [vmem:[%s0 + $0x28] sm:$0xff]
  %v29 = vld [vmem:[%s0 + $0x30] sm:$0xff]
  %v30 = vld [vmem:[%s0 + $0x38] sm:$0xff]
  %v31 = vld [vmem:[%s0 + $0x40] sm:$0xff]
  %v32 = vld [vmem:[%s0 + $0x48] sm:$0xff]
  %v33 = vld [vmem:[%s0 + $0x50] sm:$0xff]
  %v34 = vld [vmem:[%s0 + $0x58] sm:$0xff]
  %v35 = vld [vmem:[%s0 + $0x60] sm:$0xff]
  %v36 = vld [vmem:[%s0 + $0x68] sm:$0xff]
  %v37 = vld [vmem:[%s0 + $0x70] sm:$0xff]
  %v38 = vld [vmem:[%s0 + $0x78] sm:$0xff]
  %v39 = vld [vmem:[%s1] sm:$0x1]
  %v41 = vlaneseq
  %v42 = vshrl.u32 %v41, 7
  %v43 = vsub.s32 0, %v42
  %v44 = vrot.slane %v39, %v43
  %v46 = vmul.f32 %v23, %v44
  %v47 = vmul.f32 %v24, %v44
  %v48 = vmul.f32 %v25, %v44
  %v49 = vmul.f32 %v26, %v44
  %v50 = vmul.f32 %v27, %v44
  %v51 = vmul.f32 %v28, %v44
  %v52 = vmul.f32 %v29, %v44
  %v53 = vmul.f32 %v30, %v44
  %v54 = vmul.f32 %v31, %v44
  %v55 = vmul.f32 %v32, %v44
  %v56 = vmul.f32 %v33, %v44
  %v57 = vmul.f32 %v34, %v44
  %v58 = vmul.f32 %v35, %v44
  %v59 = vmul.f32 %v36, %v44
  %v60 = vmul.f32 %v37, %v44
  %v61 = vmul.f32 %v38, %v44
  %v62 = vld [vmem:[%s2] sm:$0x1]
  %v64 = vlaneseq
  %v65 = vshrl.u32 %v64, 7
  %v66 = vsub.s32 0, %v65
  %v67 = vrot.slane %v62, %v66
  %v69 = vadd.f32 %v46, %v67
  %v70 = vadd.f32 %v47, %v67
  %v71 = vadd.f32 %v48, %v67
  %v72 = vadd.f32 %v49, %v67
  %v73 = vadd.f32 %v50, %v67
  %v74 = vadd.f32 %v51, %v67
  %v75 = vadd.f32 %v52, %v67
  %v76 = vadd.f32 %v53, %v67
  %v77 = vadd.f32 %v54, %v67
  %v78 = vadd.f32 %v55, %v67
  %v79 = vadd.f32 %v56, %v67
  %v80 = vadd.f32 %v57, %v67
  %v81 = vadd.f32 %v58, %v67
  %v82 = vadd.f32 %v59, %v67
  %v83 = vadd.f32 %v60, %v67
  %v84 = vadd.f32 %v61, %v67
  %v85 = vld [vmem:[%s3] sm:$0xff]
  %v86 = vld [vmem:[%s3 + $0x8] sm:$0xff]
  %v87 = vld [vmem:[%s3 + $0x10] sm:$0xff]
  %v88 = vld [vmem:[%s3 + $0x18] sm:$0xff]
  %v89 = vld [vmem:[%s3 + $0x20] sm:$0xff]
  %v90 = vld [vmem:[%s3 + $0x28] sm:$0xff]
  %v91 = vld [vmem:[%s3 + $0x30] sm:$0xff]
  %v92 = vld [vmem:[%s3 + $0x38] sm:$0xff]
  %v93 = vld [vmem:[%s3 + $0x40] sm:$0xff]
  %v94 = vld [vmem:[%s3 + $0x48] sm:$0xff]
  %v95 = vld [vmem:[%s3 + $0x50] sm:$0xff]
  %v96 = vld [vmem:[%s3 + $0x58] sm:$0xff]
  %v97 = vld [vmem:[%s3 + $0x60] sm:$0xff]
  %v98 = vld [vmem:[%s3 + $0x68] sm:$0xff]
  %v99 = vld [vmem:[%s3 + $0x70] sm:$0xff]
  %v100 = vld [vmem:[%s3 + $0x78] sm:$0xff]
  %v101 = vld [vmem:[%s4] sm:$0x1]
  %v103 = vlaneseq
  %v104 = vshrl.u32 %v103, 7
  %v105 = vsub.s32 0, %v104
  %v106 = vrot.slane %v101, %v105
  %v108 = vmul.f32 %v85, %v106
  %v109 = vmul.f32 %v86, %v106
  %v110 = vmul.f32 %v87, %v106
  %v111 = vmul.f32 %v88, %v106
  %v112 = vmul.f32 %v89, %v106
  %v113 = vmul.f32 %v90, %v106
  %v114 = vmul.f32 %v91, %v106
  %v115 = vmul.f32 %v92, %v106
  %v116 = vmul.f32 %v93, %v106
  %v117 = vmul.f32 %v94, %v106
  %v118 = vmul.f32 %v95, %v106
  %v119 = vmul.f32 %v96, %v106
  %v120 = vmul.f32 %v97, %v106
  %v121 = vmul.f32 %v98, %v106
  %v122 = vmul.f32 %v99, %v106
  %v123 = vmul.f32 %v100, %v106
  %v124 = vadd.f32 %v69, %v108
  %v125 = vadd.f32 %v70, %v109
  %v126 = vadd.f32 %v71, %v110
  %v127 = vadd.f32 %v72, %v111
  %v128 = vadd.f32 %v73, %v112
  %v129 = vadd.f32 %v74, %v113
  %v130 = vadd.f32 %v75, %v114
  %v131 = vadd.f32 %v76, %v115
  %v132 = vadd.f32 %v77, %v116
  %v133 = vadd.f32 %v78, %v117
  %v134 = vadd.f32 %v79, %v118
  %v135 = vadd.f32 %v80, %v119
  %v136 = vadd.f32 %v81, %v120
  %v137 = vadd.f32 %v82, %v121
  %v138 = vadd.f32 %v83, %v122
  %v139 = vadd.f32 %v84, %v123
  %v140 = vld [vmem:[%s5] sm:$0x1]
  %v142 = vlaneseq
  %v143 = vshrl.u32 %v142, 7
  %v144 = vsub.s32 0, %v143
  %v145 = vrot.slane %v140, %v144
  %v147 = vadd.f32 %v124, %v145
  %v148 = vadd.f32 %v125, %v145
  %v149 = vadd.f32 %v126, %v145
  %v150 = vadd.f32 %v127, %v145
  %v151 = vadd.f32 %v128, %v145
  %v152 = vadd.f32 %v129, %v145
  %v153 = vadd.f32 %v130, %v145
  %v154 = vadd.f32 %v131, %v145
  %v155 = vadd.f32 %v132, %v145
  %v156 = vadd.f32 %v133, %v145
  %v157 = vadd.f32 %v134, %v145
  %v158 = vadd.f32 %v135, %v145
  %v159 = vadd.f32 %v136, %v145
  %v160 = vadd.f32 %v137, %v145
  %v161 = vadd.f32 %v138, %v145
  %v162 = vadd.f32 %v139, %v145
  %v163 = vmax.f32 %v147, 0.0
  %v164 = vmax.f32 %v148, 0.0
  %v165 = vmax.f32 %v149, 0.0
  %v166 = vmax.f32 %v150, 0.0
  %v167 = vmax.f32 %v151, 0.0
  %v168 = vmax.f32 %v152, 0.0
  %v169 = vmax.f32 %v153, 0.0
  %v170 = vmax.f32 %v154, 0.0
  %v171 = vmax.f32 %v155, 0.0
  %v172 = vmax.f32 %v156, 0.0
  %v173 = vmax.f32 %v157, 0.0
  %v174 = vmax.f32 %v158, 0.0
  %v175 = vmax.f32 %v159, 0.0
  %v176 = vmax.f32 %v160, 0.0
  %v177 = vmax.f32 %v161, 0.0
  %v178 = vmax.f32 %v162, 0.0
  %179 = vst [vmem:[%s6] sm:$0xff] %v163
  %180 = vst [vmem:[%s6 + $0x8] sm:$0xff] %v164
  %181 = vst [vmem:[%s6 + $0x10] sm:$0xff] %v165
  %182 = vst [vmem:[%s6 + $0x18] sm:$0xff] %v166
  %183 = vst [vmem:[%s6 + $0x20] sm:$0xff] %v167
  %184 = vst [vmem:[%s6 + $0x28] sm:$0xff] %v168
  %185 = vst [vmem:[%s6 + $0x30] sm:$0xff] %v169
  %186 = vst [vmem:[%s6 + $0x38] sm:$0xff] %v170
  %187 = vst [vmem:[%s6 + $0x40] sm:$0xff] %v171
  %188 = vst [vmem:[%s6 + $0x48] sm:$0xff] %v172
  %189 = vst [vmem:[%s6 + $0x50] sm:$0xff] %v173
  %190 = vst [vmem:[%s6 + $0x58] sm:$0xff] %v174
  %191 = vst [vmem:[%s6 + $0x60] sm:$0xff] %v175
  %192 = vst [vmem:[%s6 + $0x68] sm:$0xff] %v176
  %193 = vst [vmem:[%s6 + $0x70] sm:$0xff] %v177
  %194 = vst [vmem:[%s6 + $0x78] sm:$0xff] %v178
  // Predicated region
  $region26: #{residual_block_forward.9} parent=0 // pred_check
    _
  $region27: #{residual_block_forward.9} parent=0 // pred_check_branch
    %196 = sbr.rel (0) target = $region29
  $region28: #{residual_block_forward.9} parent=0 // pred_region
    _
  $region29: #{residual_block_forward.9} parent=0 // pred_fallthru
    _
  // Predicated region
  $region30: #{residual_block_forward.9} parent=0 // pred_check
    _
  $region31: #{residual_block_forward.9} parent=0 // pred_check_branch
    %198 = sbr.rel (0) target = $region33
  $region32: #{residual_block_forward.9} parent=0 // pred_region
    _
  $region33: #{residual_block_forward.9} parent=0 // pred_fallthru
    _

</llo_original>
